<compile_context>
chip_gen: v6e
topology: v6e:2x2x1
jax: 0.10.0
libtpu: 0.0.40
codegen_flags: <defaults>
</compile_context>

<pallas_src>
import math

import jax
import jax.numpy as jnp
from jax.experimental import pallas as pl
from jax.experimental.pallas import tpu as pltpu

SUBLANE = 8            # sublane granularity (second-to-last dim of a block)
MAX_BATCH_TILE = 8192  # ~7 MiB VMEM per step at hidden=64 -> fits all generations
MIN_SPLIT_BATCH = 2048 # above this, force >=2 grid steps so v7x megacore engages


def _cdiv(a, b):
    return -(-a // b)


def _round_up(n, m):
    return ((n + m - 1) // m) * m


def dqn_kernel(x_ref, w1_ref, b1_ref, w2_ref, b2_ref, w3_ref, b3_ref, o_ref):
    # x tile arrives unpadded (bt, state_dim) f32; cast to bf16 in VMEM only.
    x = x_ref[...].astype(jnp.bfloat16)

    # affine1 + ReLU   (MXU bf16 operands, f32 accumulate; bias/ReLU in f32 on VPU)
    h1 = jnp.dot(x, w1_ref[...], preferred_element_type=jnp.float32) + b1_ref[...]
    h1 = jnp.maximum(h1, 0.0).astype(jnp.bfloat16)

    # affine2 + ReLU
    h2 = jnp.dot(h1, w2_ref[...], preferred_element_type=jnp.float32) + b2_ref[...]
    h2 = jnp.maximum(h2, 0.0).astype(jnp.bfloat16)

    # affine3 (no activation), stored unpadded as (bt, action_dim) f32.
    out = jnp.dot(h2, w3_ref[...], preferred_element_type=jnp.float32) + b3_ref[...]
    o_ref[...] = out.astype(o_ref.dtype)


def prepare_params(w1, b1, w2, b2, w3, b3):
    """One-time (outside the per-call path) cast/reshape of the parameters.

    Weights (in_features, out_features) -> bf16; biases -> f32 row vectors (1, N).
    """
    return (w1.astype(jnp.bfloat16), b1.reshape(1, -1).astype(jnp.float32),
            w2.astype(jnp.bfloat16), b2.reshape(1, -1).astype(jnp.float32),
            w3.astype(jnp.bfloat16), b3.reshape(1, -1).astype(jnp.float32))


@jax.jit
def dqn_forward(x, w1, b1, w2, b2, w3, b3):
    """Fused DQN MLP forward.

    x:  (batch, state_dim) f32
    w*: bf16 (in_features, out_features)  -- from prepare_params
    b*: f32  (1, out_features)            -- from prepare_params
    returns (batch, action_dim) f32
    """
    batch, state_dim = x.shape
    hidden_dim = w1.shape[1]
    action_dim = w3.shape[1]

    # Batch tiling:
    #  * single tile for small/latency-bound batches (no padding beyond 8 rows),
    #  * >= 2 tiles once batch > MIN_SPLIT_BATCH (v7x megacore sees parallel work),
    #  * tiles capped at MAX_BATCH_TILE rows to stay well inside scoped VMEM.
    n_tiles = max(_cdiv(batch, MAX_BATCH_TILE), 2 if batch > MIN_SPLIT_BATCH else 1)
    bt = _round_up(_cdiv(batch, n_tiles), SUBLANE)
    bp = n_tiles * bt                      # padded batch; waste <= 8 * n_tiles rows
    xp = x if bp == batch else jnp.pad(x, ((0, bp - batch), (0, 0)))

    def resident(shape):
        # Same block every grid step -> weights/biases stay resident in VMEM.
        return pl.BlockSpec(shape, lambda i: tuple(0 for _ in shape))

    out = pl.pallas_call(
        dqn_kernel,
        out_shape=jax.ShapeDtypeStruct((bp, action_dim), jnp.float32),
        grid_spec=pl.GridSpec(
            grid=(n_tiles,),
            in_specs=[
                pl.BlockSpec((bt, state_dim), lambda i: (i, 0)),  # x tile (pipelined)
                resident((state_dim, hidden_dim)),                # W1
                resident((1, hidden_dim)),                        # b1
                resident((hidden_dim, hidden_dim)),               # W2
                resident((1, hidden_dim)),                        # b2
                resident((hidden_dim, action_dim)),               # W3
                resident((1, action_dim)),                        # b3
            ],
            out_specs=pl.BlockSpec((bt, action_dim), lambda i: (i, 0)),
        ),
        compiler_params=pltpu.CompilerParams(
            dimension_semantics=("parallel",),                    # megacore on v7x
        ),
    )(xp, w1, b1, w2, b2, w3, b3)

    return out if bp == batch else out[:batch]


def init_linear_params(key, in_features, out_features):
    """torch.nn.Linear-style init: U[-1/sqrt(fan_in), 1/sqrt(fan_in)].

    Weight returned as (in_features, out_features) (transposed vs PyTorch storage),
    bias as (out_features,).
    """
    k_w, k_b = jax.random.split(key)
    bound = 1.0 / math.sqrt(in_features)
    w = jax.random.uniform(k_w, (in_features, out_features), jnp.float32,
                           minval=-bound, maxval=bound)
    b = jax.random.uniform(k_b, (out_features,), jnp.float32,
                           minval=-bound, maxval=bound)
    return w, b


def _ref_forward_f32(x, w1, b1, w2, b2, w3, b3):
    h1 = jnp.maximum(x @ w1 + b1, 0.0)
    h2 = jnp.maximum(h1 @ w2 + b2, 0.0)
    return h2 @ w3 + b3


def _ref_forward_bf16(x, w1, b1, w2, b2, w3, b3):
    bf = jnp.bfloat16
    h1 = jnp.maximum(
        jnp.dot(x.astype(bf), w1.astype(bf), preferred_element_type=jnp.float32) + b1, 0.0)
    h2 = jnp.maximum(
        jnp.dot(h1.astype(bf), w2.astype(bf), preferred_element_type=jnp.float32) + b2, 0.0)
    return jnp.dot(h2.astype(bf), w3.astype(bf), preferred_element_type=jnp.float32) + b3


if __name__ == "__main__":
    # Small env-like dims (e.g. CartPole): state_dim=4, action_dim=2, hidden=64.
    batch = 2
    state_dim = 4
    hidden_dim = 64
    action_dim = 2

    root = jax.random.PRNGKey(0)
    k_x, k1, k2, k3, k_big = jax.random.split(root, 5)

    x = jax.random.normal(k_x, (batch, state_dim), jnp.float32)
    w1, b1 = init_linear_params(k1, state_dim, hidden_dim)
    w2, b2 = init_linear_params(k2, hidden_dim, hidden_dim)
    w3, b3 = init_linear_params(k3, hidden_dim, action_dim)

    # Pre-cast parameters once, outside the per-call path.
    params = prepare_params(w1, b1, w2, b2, w3, b3)

    out = jax.block_until_ready(dqn_forward(x, *params))
    assert out.shape == (batch, action_dim)

    # Tight check vs a reference using the same bf16-operand / f32-accumulate path.
    ref_bf16 = _ref_forward_bf16(x, w1, b1, w2, b2, w3, b3)
    assert jnp.allclose(out, ref_bf16, atol=1e-4, rtol=1e-4)

    # Loose check vs the pure-f32 reference (bf16 operand rounding only).
    # TODO(synk): bf16 operands trade ~3 decimal digits for 2x less DMA; use f32
    # weights if bit-level parity with the PyTorch f32 module is required.
    ref_f32 = _ref_forward_f32(x, w1, b1, w2, b2, w3, b3)
    assert jnp.allclose(out, ref_f32, atol=2e-2, rtol=2e-2)

    # Exercise the multi-tile path (row padding + >=2 grid steps / megacore split).
    big_batch = 4100
    x_big = jax.random.normal(k_big, (big_batch, state_dim), jnp.float32)
    out_big = jax.block_until_ready(dqn_forward(x_big, *params))
    assert out_big.shape == (big_batch, action_dim)
    assert jnp.allclose(out_big, _ref_forward_f32(x_big, w1, b1, w2, b2, w3, b3),
                        atol=2e-2, rtol=2e-2)

    print("KERNEL_OK")
</pallas_src>

<mosaic_0001>
module attributes {stable_mosaic.version = 11 : i64} {
  func.func @dqn_kernel(%arg0: i32, %arg1: memref<8x4xf32, #tpu.memory_space<vmem>>, %arg2: memref<4x64xbf16, #tpu.memory_space<vmem>>, %arg3: memref<1x64xf32, #tpu.memory_space<vmem>>, %arg4: memref<64x64xbf16, #tpu.memory_space<vmem>>, %arg5: memref<1x64xf32, #tpu.memory_space<vmem>>, %arg6: memref<64x2xbf16, #tpu.memory_space<vmem>>, %arg7: memref<1x2xf32, #tpu.memory_space<vmem>>, %arg8: memref<8x2xf32, #tpu.memory_space<vmem>>) attributes {dimension_semantics = [#tpu.dimension_semantics<parallel>], iteration_bounds = array<i64: 1>, scalar_prefetch = 0 : i64, scratch_operands = 0 : i64, tpu.core_type = #tpu.core_type<tc>, window_params = [{transform_indices = @transform_0, window_bounds = array<i64: 8, 4>}, {pipeline_mode = #tpu.pipeline_mode<synchronous>, transform_indices = @transform_1, window_bounds = array<i64: 4, 64>}, {pipeline_mode = #tpu.pipeline_mode<synchronous>, transform_indices = @transform_2, window_bounds = array<i64: 1, 64>}, {pipeline_mode = #tpu.pipeline_mode<synchronous>, transform_indices = @transform_3, window_bounds = array<i64: 64, 64>}, {pipeline_mode = #tpu.pipeline_mode<synchronous>, transform_indices = @transform_4, window_bounds = array<i64: 1, 64>}, {pipeline_mode = #tpu.pipeline_mode<synchronous>, transform_indices = @transform_5, window_bounds = array<i64: 64, 2>}, {pipeline_mode = #tpu.pipeline_mode<synchronous>, transform_indices = @transform_6, window_bounds = array<i64: 1, 2>}, {transform_indices = @transform_7, window_bounds = array<i64: 8, 2>}]} {
    %c0 = arith.constant 0 : index
    %c0_0 = arith.constant 0 : index
    %0 = vector.load %arg1[%c0, %c0_0] : memref<8x4xf32, #tpu.memory_space<vmem>>, vector<8x4xf32>
    %1 = arith.truncf %0 : vector<8x4xf32> to vector<8x4xbf16>
    %c0_1 = arith.constant 0 : index
    %c0_2 = arith.constant 0 : index
    %2 = vector.load %arg2[%c0_1, %c0_2] : memref<4x64xbf16, #tpu.memory_space<vmem>>, vector<4x64xbf16>
    %cst = arith.constant dense<0.000000e+00> : vector<8x64xf32>
    %3 = tpu.matmul %1, %2, %cst {dimension_numbers = #tpu.dot_dimension_numbers<[1], [0], [0], [1], [0, 0, 1, 1], [], []>} : vector<8x4xbf16>, vector<4x64xbf16>, vector<8x64xf32> -> vector<8x64xf32>
    %c0_3 = arith.constant 0 : index
    %c0_4 = arith.constant 0 : index
    %4 = vector.load %arg3[%c0_3, %c0_4] : memref<1x64xf32, #tpu.memory_space<vmem>>, vector<1x64xf32>
    %5 = vector.broadcast %4 : vector<1x64xf32> to vector<8x64xf32>
    %6 = arith.addf %3, %5 : vector<8x64xf32>
    %cst_5 = arith.constant 0.000000e+00 : f32
    %7 = vector.broadcast %cst_5 : f32 to vector<8x64xf32>
    %8 = arith.maximumf %6, %7 : vector<8x64xf32>
    %9 = arith.truncf %8 : vector<8x64xf32> to vector<8x64xbf16>
    %c0_6 = arith.constant 0 : index
    %c0_7 = arith.constant 0 : index
    %10 = vector.load %arg4[%c0_6, %c0_7] : memref<64x64xbf16, #tpu.memory_space<vmem>>, vector<64x64xbf16>
    %cst_8 = arith.constant dense<0.000000e+00> : vector<8x64xf32>
    %11 = tpu.matmul %9, %10, %cst_8 {dimension_numbers = #tpu.dot_dimension_numbers<[1], [0], [0], [1], [0, 0, 1, 1], [], []>} : vector<8x64xbf16>, vector<64x64xbf16>, vector<8x64xf32> -> vector<8x64xf32>
    %c0_9 = arith.constant 0 : index
    %c0_10 = arith.constant 0 : index
    %12 = vector.load %arg5[%c0_9, %c0_10] : memref<1x64xf32, #tpu.memory_space<vmem>>, vector<1x64xf32>
    %13 = vector.broadcast %12 : vector<1x64xf32> to vector<8x64xf32>
    %14 = arith.addf %11, %13 : vector<8x64xf32>
    %cst_11 = arith.constant 0.000000e+00 : f32
    %15 = vector.broadcast %cst_11 : f32 to vector<8x64xf32>
    %16 = arith.maximumf %14, %15 : vector<8x64xf32>
    %17 = arith.truncf %16 : vector<8x64xf32> to vector<8x64xbf16>
    %c0_12 = arith.constant 0 : index
    %c0_13 = arith.constant 0 : index
    %18 = vector.load %arg6[%c0_12, %c0_13] : memref<64x2xbf16, #tpu.memory_space<vmem>>, vector<64x2xbf16>
    %cst_14 = arith.constant dense<0.000000e+00> : vector<8x2xf32>
    %19 = tpu.matmul %17, %18, %cst_14 {dimension_numbers = #tpu.dot_dimension_numbers<[1], [0], [0], [1], [0, 0, 1, 1], [], []>} : vector<8x64xbf16>, vector<64x2xbf16>, vector<8x2xf32> -> vector<8x2xf32>
    %c0_15 = arith.constant 0 : index
    %c0_16 = arith.constant 0 : index
    %20 = vector.load %arg7[%c0_15, %c0_16] : memref<1x2xf32, #tpu.memory_space<vmem>>, vector<1x2xf32>
    %21 = vector.broadcast %20 : vector<1x2xf32> to vector<8x2xf32>
    %22 = arith.addf %19, %21 : vector<8x2xf32>
    %c0_17 = arith.constant 0 : index
    %c0_18 = arith.constant 0 : index
    %23 = vector.load %arg8[%c0_17, %c0_18] : memref<8x2xf32, #tpu.memory_space<vmem>>, vector<8x2xf32>
    tpu.vector_store %arg8[%c0_17, %c0_18], %22 {strides = array<i32>} : memref<8x2xf32, #tpu.memory_space<vmem>>, vector<8x2xf32>,
    return
  }
  func.func @transform_0(%arg0: i32) -> (i32, i32) {
    %c0_i32 = arith.constant 0 : i32
    %c0_i32_0 = arith.constant 0 : i32
    return %arg0, %c0_i32 : i32, i32
  }
  func.func @transform_1(%arg0: i32) -> (i32, i32) {
    %c0_i32 = arith.constant 0 : i32
    %c0_i32_0 = arith.constant 0 : i32
    %c0_i32_1 = arith.constant 0 : i32
    return %c0_i32, %c0_i32_0 : i32, i32
  }
  func.func @transform_2(%arg0: i32) -> (i32, i32) {
    %c0_i32 = arith.constant 0 : i32
    %c0_i32_0 = arith.constant 0 : i32
    %c0_i32_1 = arith.constant 0 : i32
    return %c0_i32, %c0_i32_0 : i32, i32
  }
  func.func @transform_3(%arg0: i32) -> (i32, i32) {
    %c0_i32 = arith.constant 0 : i32
    %c0_i32_0 = arith.constant 0 : i32
    %c0_i32_1 = arith.constant 0 : i32
    return %c0_i32, %c0_i32_0 : i32, i32
  }
  func.func @transform_4(%arg0: i32) -> (i32, i32) {
    %c0_i32 = arith.constant 0 : i32
    %c0_i32_0 = arith.constant 0 : i32
    %c0_i32_1 = arith.constant 0 : i32
    return %c0_i32, %c0_i32_0 : i32, i32
  }
  func.func @transform_5(%arg0: i32) -> (i32, i32) {
    %c0_i32 = arith.constant 0 : i32
    %c0_i32_0 = arith.constant 0 : i32
    %c0_i32_1 = arith.constant 0 : i32
    return %c0_i32, %c0_i32_0 : i32, i32
  }
  func.func @transform_6(%arg0: i32) -> (i32, i32) {
    %c0_i32 = arith.constant 0 : i32
    %c0_i32_0 = arith.constant 0 : i32
    %c0_i32_1 = arith.constant 0 : i32
    return %c0_i32, %c0_i32_0 : i32, i32
  }
  func.func @transform_7(%arg0: i32) -> (i32, i32) {
    %c0_i32 = arith.constant 0 : i32
    %c0_i32_0 = arith.constant 0 : i32
    return %arg0, %c0_i32 : i32, i32
  }
}

</mosaic_0001>

<llo_original>
// kernel: dqn_forward.1
$region0: #{dqn_forward.1}
  #allocation0 [shape = 'u32[]', space=smem, size = 0x4, offset = 0x4, fixed_abs, tag = 'smem constant byte address 0x4 - core index']
  #allocation1 [shape = 'u32[144,128]{1,0:T(1,128)}', space=vmem, size = 0x12000, scoped, tag = 'internal scratch']
  %s0 = inlined_call_operand.vmem [shape: f32[8,4], index: 0, kind: input, shape index: {}]
  %s1 = inlined_call_operand.vmem [shape: bf16[4,64], index: 1, kind: input, shape index: {}]
  %s2 = inlined_call_operand.vmem [shape: f32[1,64], index: 2, kind: input, shape index: {}]
  %s3 = inlined_call_operand.vmem [shape: bf16[64,64], index: 3, kind: input, shape index: {}]
  %s4 = inlined_call_operand.vmem [shape: f32[1,64], index: 4, kind: input, shape index: {}]
  %s5 = inlined_call_operand.vmem [shape: bf16[64,2], index: 5, kind: input, shape index: {}]
  %s6 = inlined_call_operand.vmem [shape: f32[1,2], index: 6, kind: input, shape index: {}]
  %s7 = inlined_call_operand.vmem [shape: f32[8,2], index: 7, kind: output, shape index: {}]
  %s8 = sld [smem:[#allocation0]]
  $region38: #{dqn_forward.1} parent=0
    _
  %s10 = ssub.s32 1, %s8
  %s11 = scalar_select 0, %s10, %s8
  // Predicated region
  $region2: #{dqn_forward.1} parent=0 // pred_check
    _
  $region3: #{dqn_forward.1} parent=0 // pred_check_branch
    %13 = sbr.rel (0) target = $region5
  $region4: #{dqn_forward.1} parent=0 // pred_region
    _
  $region5: #{dqn_forward.1} parent=0 // pred_fallthru
    _
  // Predicated region
  $region6: #{dqn_forward.1} parent=0 // pred_check
    _
  $region7: #{dqn_forward.1} parent=0 // pred_check_branch
    %15 = sbr.rel (0) target = $region9
  $region8: #{dqn_forward.1} parent=0 // pred_region
    _
  $region9: #{dqn_forward.1} parent=0 // pred_fallthru
    _
  // Predicated region
  $region10: #{dqn_forward.1} parent=0 // pred_check
    _
  $region11: #{dqn_forward.1} parent=0 // pred_check_branch
    %17 = sbr.rel (0) target = $region13
  $region12: #{dqn_forward.1} parent=0 // pred_region
    _
  $region13: #{dqn_forward.1} parent=0 // pred_fallthru
    _
  // Predicated region
  $region14: #{dqn_forward.1} parent=0 // pred_check
    _
  $region15: #{dqn_forward.1} parent=0 // pred_check_branch
    %19 = sbr.rel (0) target = $region17
  $region16: #{dqn_forward.1} parent=0 // pred_region
    _
  $region17: #{dqn_forward.1} parent=0 // pred_fallthru
    _
  // Predicated region
  $region18: #{dqn_forward.1} parent=0 // pred_check
    _
  $region19: #{dqn_forward.1} parent=0 // pred_check_branch
    %21 = sbr.rel (0) target = $region21
  $region20: #{dqn_forward.1} parent=0 // pred_region
    _
  $region21: #{dqn_forward.1} parent=0 // pred_fallthru
    _
  // Predicated region
  $region22: #{dqn_forward.1} parent=0 // pred_check
    _
  $region23: #{dqn_forward.1} parent=0 // pred_check_branch
    %23 = sbr.rel (0) target = $region25
  $region24: #{dqn_forward.1} parent=0 // pred_region
    _
  $region25: #{dqn_forward.1} parent=0 // pred_fallthru
    _
  // Predicated region
  $region26: #{dqn_forward.1} parent=0 // pred_check
    _
  $region27: #{dqn_forward.1} parent=0 // pred_check_branch
    %25 = sbr.rel (0) target = $region29
  $region28: #{dqn_forward.1} parent=0 // pred_region
    _
  $region29: #{dqn_forward.1} parent=0 // pred_fallthru
    _
  %v27 = vld [vmem:[%s0] sm:$0xff]
  %v28 = vpack.c.bf16 %v27, %v27
  %v29 = vld [vmem:[%s1] sm:$0x3]
  %v30 = vld [vmem:[%s2] sm:$0x1]
  %v32 = vlaneseq
  %v33 = vshrl.u32 %v32, 7
  %v34 = vsub.s32 0, %v33
  %v35 = vrot.slane %v30, %v34
  %vm37 = vcmask 31744
  %v39 = vsel %vm37, %v28, 0
  %vm41 = vcmask 1041408
  %v43 = vsel %vm41, %v29, 0
  %45 = vmatprep.subr.bf16.mxu0 0
  %46 = vmatpush1.bf16.msra.mxu0 0
  %47 = vmatprep.subr.bf16.mxu0 0
  %48 = vmatpush1.bf16.msra.mxu0 0
  %49 = vmatprep.subr.bf16.mxu0 0
  %50 = vmatpush1.bf16.msra.mxu0 0
  %51 = vmatprep.subr.bf16.mxu0 0
  %52 = vmatpush1.bf16.msra.mxu0 0
  %53 = vmatprep.subr.bf16.mxu0 0
  %54 = vmatpush1.bf16.msra.mxu0 0
  %55 = vmatprep.subr.bf16.mxu0 0
  %56 = vmatpush1.bf16.msra.mxu0 0
  %57 = vmatprep.subr.bf16.mxu0 0
  %58 = vmatpush1.bf16.msra.mxu0 0
  %59 = vmatprep.subr.bf16.mxu0 0
  %60 = vmatpush1.bf16.msra.mxu0 %v43
  %61 = vmatprep.subr.bf16.mxu0 0
  %62 = vmatpush2.bf16.msra.mxu0 0
  %63 = vmatprep.subr.bf16.mxu0 0
  %64 = vmatpush2.bf16.msra.mxu0 0
  %65 = vmatprep.subr.bf16.mxu0 0
  %66 = vmatpush2.bf16.msra.mxu0 0
  %67 = vmatprep.subr.bf16.mxu0 0
  %68 = vmatpush2.bf16.msra.mxu0 0
  %69 = vmatprep.subr.bf16.mxu0 0
  %70 = vmatpush2.bf16.msra.mxu0 0
  %71 = vmatprep.subr.bf16.mxu0 0
  %72 = vmatpush2.bf16.msra.mxu0 0
  %73 = vmatprep.subr.bf16.mxu0 0
  %74 = vmatpush2.bf16.msra.mxu0 0
  %75 = vmatprep.subr.bf16.mxu0 0
  %76 = vmatpush2.bf16.msra.mxu0 0
  %77 = vmatprep.mubr.bf16.mxu0 0
  %78 = vmatmul.mubr.bf16.gmra.mxu0 %v39
  %v79 = vpop.f32.mrf.mxu0
  %v80 = vadd.f32 %v35, %v79
  %v81 = vpop.f32.mrf.mxu0
  %v82 = vpop.f32.mrf.mxu0
  %v83 = vpop.f32.mrf.mxu0
  %84 = vdwg.mxu0
  %v85 = vmax.f32 %v80, 0.0
  %v86 = vpack.c.bf16 %v85, %v85
  %v87 = vld [vmem:[%s3] sm:$0xf]
  %v88 = vld [vmem:[%s3 + $0x4] sm:$0xf]
  %v89 = vld [vmem:[%s3 + $0x8] sm:$0xf]
  %v90 = vld [vmem:[%s3 + $0xc] sm:$0xf]
  %v91 = vld [vmem:[%s3 + $0x10] sm:$0xf]
  %v92 = vld [vmem:[%s3 + $0x14] sm:$0xf]
  %v93 = vld [vmem:[%s3 + $0x18] sm:$0xf]
  %v94 = vld [vmem:[%s3 + $0x1c] sm:$0xf]
  %v95 = vld [vmem:[%s4] sm:$0x1]
  %v97 = vlaneseq
  %v98 = vshrl.u32 %v97, 7
  %v99 = vsub.s32 0, %v98
  %v100 = vrot.slane %v95, %v99
  %v110 = vunpack.c.l.b16 %v87
  %v111 = vunpack.c.l.b16 %v88
  %v112 = vunpack.c.l.b16 %v89
  %v113 = vunpack.c.l.b16 %v90
  %v114 = vunpack.c.l.b16 %v91
  %v115 = vunpack.c.l.b16 %v92
  %v116 = vunpack.c.l.b16 %v93
  %v117 = vunpack.c.l.b16 %v94
  %v118 = vpack.c.b16 %v111, %v110
  %v119 = vpack.c.b16 %v113, %v112
  %v120 = vpack.c.b16 %v115, %v114
  %v121 = vpack.c.b16 %v117, %v116
  %vm126 = vcmask 523264
  %v128 = vsel %vm126, %v86, 0
  %130 = vmatprep.subr.bf16.mxu0 0
  %131 = vmatpush1.bf16.msra.mxu0 0
  %132 = vmatprep.subr.bf16.mxu0 0
  %133 = vmatpush1.bf16.msra.mxu0 0
  %134 = vmatprep.subr.bf16.mxu0 0
  %135 = vmatpush1.bf16.msra.mxu0 0
  %136 = vmatprep.subr.bf16.mxu0 0
  %137 = vmatpush1.bf16.msra.mxu0 0
  %138 = vmatprep.subr.bf16.mxu0 0
  %139 = vmatpush1.bf16.msra.mxu0 %v121
  %140 = vmatprep.subr.bf16.mxu0 0
  %141 = vmatpush1.bf16.msra.mxu0 %v120
  %142 = vmatprep.subr.bf16.mxu0 0
  %143 = vmatpush1.bf16.msra.mxu0 %v119
  %144 = vmatprep.subr.bf16.mxu0 0
  %145 = vmatpush1.bf16.msra.mxu0 %v118
  %146 = vmatprep.subr.bf16.mxu0 0
  %147 = vmatpush2.bf16.msra.mxu0 0
  %148 = vmatprep.subr.bf16.mxu0 0
  %149 = vmatpush2.bf16.msra.mxu0 0
  %150 = vmatprep.subr.bf16.mxu0 0
  %151 = vmatpush2.bf16.msra.mxu0 0
  %152 = vmatprep.subr.bf16.mxu0 0
  %153 = vmatpush2.bf16.msra.mxu0 0
  %154 = vmatprep.subr.bf16.mxu0 0
  %155 = vmatpush2.bf16.msra.mxu0 0
  %156 = vmatprep.subr.bf16.mxu0 0
  %157 = vmatpush2.bf16.msra.mxu0 0
  %158 = vmatprep.subr.bf16.mxu0 0
  %159 = vmatpush2.bf16.msra.mxu0 0
  %160 = vmatprep.subr.bf16.mxu0 0
  %161 = vmatpush2.bf16.msra.mxu0 0
  %162 = vmatprep.mubr.bf16.mxu0 0
  %163 = vmatmul.mubr.bf16.gmra.mxu0 %v128
  %v164 = vpop.f32.mrf.mxu0
  %v165 = vadd.f32 %v100, %v164
  %v166 = vpop.f32.mrf.mxu0
  %v167 = vpop.f32.mrf.mxu0
  %v168 = vpop.f32.mrf.mxu0
  %169 = vdwg.mxu0
  %v170 = vmax.f32 %v165, 0.0
  %v171 = vpack.c.bf16 %v170, %v170
  %v172 = vld [vmem:[%s5] sm:$0xf]
  %v173 = vld [vmem:[%s5 + $0x4] sm:$0xf]
  %v174 = vld [vmem:[%s5 + $0x8] sm:$0xf]
  %v175 = vld [vmem:[%s5 + $0xc] sm:$0xf]
  %v176 = vld [vmem:[%s5 + $0x10] sm:$0xf]
  %v177 = vld [vmem:[%s5 + $0x14] sm:$0xf]
  %v178 = vld [vmem:[%s5 + $0x18] sm:$0xf]
  %v179 = vld [vmem:[%s5 + $0x1c] sm:$0xf]
  %v180 = vld [vmem:[%s6] sm:$0x1]
  %v182 = vlaneseq
  %v183 = vshrl.u32 %v182, 7
  %v184 = vsub.s32 0, %v183
  %v185 = vrot.slane %v180, %v184
  %v195 = vunpack.c.l.b16 %v172
  %v196 = vunpack.c.l.b16 %v173
  %v197 = vunpack.c.l.b16 %v174
  %v198 = vunpack.c.l.b16 %v175
  %v199 = vunpack.c.l.b16 %v176
  %v200 = vunpack.c.l.b16 %v177
  %v201 = vunpack.c.l.b16 %v178
  %v202 = vunpack.c.l.b16 %v179
  %v203 = vpack.c.b16 %v196, %v195
  %v204 = vpack.c.b16 %v198, %v197
  %v205 = vpack.c.b16 %v200, %v199
  %v206 = vpack.c.b16 %v202, %v201
  %v212 = vsel %vm126, %v171, 0
  %214 = vmatprep.subr.bf16.mxu0 0
  %215 = vmatpush1.bf16.msra.mxu0 0
  %216 = vmatprep.subr.bf16.mxu0 0
  %217 = vmatpush1.bf16.msra.mxu0 0
  %218 = vmatprep.subr.bf16.mxu0 0
  %219 = vmatpush1.bf16.msra.mxu0 0
  %220 = vmatprep.subr.bf16.mxu0 0
  %221 = vmatpush1.bf16.msra.mxu0 0
  %222 = vmatprep.subr.bf16.mxu0 0
  %223 = vmatpush1.bf16.msra.mxu0 %v206
  %224 = vmatprep.subr.bf16.mxu0 0
  %225 = vmatpush1.bf16.msra.mxu0 %v205
  %226 = vmatprep.subr.bf16.mxu0 0
  %227 = vmatpush1.bf16.msra.mxu0 %v204
  %228 = vmatprep.subr.bf16.mxu0 0
  %229 = vmatpush1.bf16.msra.mxu0 %v203
  %230 = vmatprep.subr.bf16.mxu0 0
  %231 = vmatpush2.bf16.msra.mxu0 0
  %232 = vmatprep.subr.bf16.mxu0 0
  %233 = vmatpush2.bf16.msra.mxu0 0
  %234 = vmatprep.subr.bf16.mxu0 0
  %235 = vmatpush2.bf16.msra.mxu0 0
  %236 = vmatprep.subr.bf16.mxu0 0
  %237 = vmatpush2.bf16.msra.mxu0 0
  %238 = vmatprep.subr.bf16.mxu0 0
  %239 = vmatpush2.bf16.msra.mxu0 0
  %240 = vmatprep.subr.bf16.mxu0 0
  %241 = vmatpush2.bf16.msra.mxu0 0
  %242 = vmatprep.subr.bf16.mxu0 0
  %243 = vmatpush2.bf16.msra.mxu0 0
  %244 = vmatprep.subr.bf16.mxu0 0
  %245 = vmatpush2.bf16.msra.mxu0 0
  %246 = vmatprep.mubr.bf16.mxu0 0
  %247 = vmatmul.mubr.bf16.gmra.mxu0 %v212
  %v248 = vpop.f32.mrf.mxu0
  %v249 = vadd.f32 %v185, %v248
  %v250 = vpop.f32.mrf.mxu0
  %v251 = vpop.f32.mrf.mxu0
  %v252 = vpop.f32.mrf.mxu0
  %253 = vdwg.mxu0
  %vm254 = vcmask 15360
  %255 = vst.msk [vmem:[%s7] sm:$0xff] %vm254, %v249
  // Predicated region
  $region30: #{dqn_forward.1} parent=0 // pred_check
    _
  $region31: #{dqn_forward.1} parent=0 // pred_check_branch
    %257 = sbr.rel (0) target = $region33
  $region32: #{dqn_forward.1} parent=0 // pred_region
    _
  $region33: #{dqn_forward.1} parent=0 // pred_fallthru
    _
  // Predicated region
  $region34: #{dqn_forward.1} parent=0 // pred_check
    _
  $region35: #{dqn_forward.1} parent=0 // pred_check_branch
    %259 = sbr.rel (0) target = $region37
  $region36: #{dqn_forward.1} parent=0 // pred_region
    _
  $region37: #{dqn_forward.1} parent=0 // pred_fallthru
    _

</llo_original>
